<compile_context>
chip_gen: v7x
topology: tpu7x:2x2x1
jax: 0.10.0
libtpu: 0.0.40
codegen_flags: <defaults>
</compile_context>

<pallas_src>
import jax
import jax.numpy as jnp
from jax.experimental import pallas as pl
from jax.experimental.pallas import tpu as pltpu


def merge_kernel(x1_ref, x2_ref, w1_ref, w2_ref, b_ref, o_ref):
    # Two small MXU matmuls sharing one f32 accumulator, then bias + ReLU.
    acc = jnp.dot(
        x1_ref[...], w1_ref[...],
        preferred_element_type=jnp.float32,
        precision=jax.lax.Precision.HIGHEST,
    )
    acc = acc + jnp.dot(
        x2_ref[...], w2_ref[...],
        preferred_element_type=jnp.float32,
        precision=jax.lax.Precision.HIGHEST,
    )
    o_ref[...] = jnp.maximum(acc + b_ref[...], 0.0).astype(o_ref.dtype)


def merge_layer0(x1, x2, w1, w2, b, *, block_b=2048):
    """Forward of MergeLayer0.

    Args:
      x1: (B, dim1) f32
      x2: (B, dim2) f32
      w1: (dim1, dim4) f32  -- fc1 weight, pre-transposed to (in, out)
      w2: (dim2, dim4) f32  -- fc2 weight, pre-transposed to (in, out)
      b:  (1, dim4) f32     -- b1 + b2 (folded once)
    Returns:
      (B, dim4) f32 = relu(x1 @ w1 + x2 @ w2 + b)
    """
    B, d1 = x1.shape
    _, d2 = x2.shape
    N = w1.shape[1]

    if B <= block_b:
        # Tiny batch: single block, no grid -> no pipeline prologue, no double
        # buffering; everything lives in VMEM for the one call.
        cost = pl.CostEstimate(
            flops=2 * B * (d1 + d2) * N,
            transcendentals=0,
            bytes_accessed=4 * (B * d1 + B * d2 + d1 * N + d2 * N + N + B * N),
        )
        return pl.pallas_call(
            merge_kernel,
            out_shape=jax.ShapeDtypeStruct((B, N), jnp.float32),
            in_specs=[pl.BlockSpec(memory_space=pltpu.MemorySpace.VMEM)] * 5,
            out_specs=pl.BlockSpec(memory_space=pltpu.MemorySpace.VMEM),
            cost_estimate=cost,
        )(x1, x2, w1, w2, b)

    # Batched path: row-tiled grid; "parallel" axis lets dual-TC chips (v7x)
    # split row tiles across cores.  Guard block_b to a multiple of 8 so the
    # BlockSpec satisfies the (8, 128) sublane constraint.
    block_b = max(8, (int(block_b) // 8) * 8)
    grid = (pl.cdiv(B, block_b),)

    # Rough VMEM footprint: double-buffered x1/x2/out tiles + resident
    # weights/bias, with 2x headroom.  Only raise the scoped limit if the
    # smallest default (16 MiB on v5e) would not fit; clamp at 64 MiB (v7x).
    row_bytes = 4 * (d1 + d2 + N)
    needed = 2 * (2 * block_b * row_bytes) + 4 * ((d1 + d2) * N + N)
    vmem_limit = None
    if needed > 16 * 1024 * 1024:
        vmem_limit = min(needed, 64 * 1024 * 1024)

    return pl.pallas_call(
        merge_kernel,
        out_shape=jax.ShapeDtypeStruct((B, N), jnp.float32),
        grid=grid,
        in_specs=[
            pl.BlockSpec((block_b, d1), lambda i: (i, 0)),
            pl.BlockSpec((block_b, d2), lambda i: (i, 0)),
            pl.BlockSpec((d1, N), lambda i: (0, 0)),
            pl.BlockSpec((d2, N), lambda i: (0, 0)),
            pl.BlockSpec((1, N), lambda i: (0, 0)),
        ],
        out_specs=pl.BlockSpec((block_b, N), lambda i: (i, 0)),
        compiler_params=pltpu.CompilerParams(
            dimension_semantics=("parallel",),
            vmem_limit_bytes=vmem_limit,
        ),
    )(x1, x2, w1, w2, b)


def prepare_params(w1, b1, w2, b2):
    """Fold the two biases into one (done once); weights stay separate."""
    return w1, w2, b1 + b2


if __name__ == "__main__":
    # Module dims: dim1, dim2, dim3 (unused in forward), dim4.
    B, dim1, dim2, dim3, dim4 = 8, 32, 48, 16, 64

    key = jax.random.PRNGKey(0)
    k_x1, k_x2, k_w1, k_b1, k_w2, k_b2, k_b1b, k_b2b = jax.random.split(key, 8)

    x1 = jax.random.normal(k_x1, (B, dim1), dtype=jnp.float32)
    x2 = jax.random.normal(k_x2, (B, dim2), dtype=jnp.float32)

    # PyTorch Linear-style uniform init; weights stored pre-transposed
    # as (in_features, out_features).
    bound1 = 1.0 / (dim1 ** 0.5)
    bound2 = 1.0 / (dim2 ** 0.5)
    w1 = jax.random.uniform(k_w1, (dim1, dim4), jnp.float32, -bound1, bound1)
    b1 = jax.random.uniform(k_b1, (1, dim4), jnp.float32, -bound1, bound1)
    w2 = jax.random.uniform(k_w2, (dim2, dim4), jnp.float32, -bound2, bound2)
    b2 = jax.random.uniform(k_b2, (1, dim4), jnp.float32, -bound2, bound2)

    w1p, w2p, bp = prepare_params(w1, b1, w2, b2)

    # --- small-batch path (no grid, whole arrays resident in VMEM) ---
    out = merge_layer0(x1, x2, w1p, w2p, bp)
    out = jax.block_until_ready(out)
    ref = jnp.maximum(x1 @ w1 + b1 + x2 @ w2 + b2, 0.0)
    assert out.shape == (B, dim4)
    assert jnp.allclose(out, ref, atol=1e-5, rtol=1e-5)

    # --- batched path (row-tiled grid with a padded tail block) ---
    Bb = 40  # not a multiple of block_b -> exercises masked tail writeback
    x1b = jax.random.normal(k_b1b, (Bb, dim1), dtype=jnp.float32)
    x2b = jax.random.normal(k_b2b, (Bb, dim2), dtype=jnp.float32)
    out_b = merge_layer0(x1b, x2b, w1p, w2p, bp, block_b=16)
    out_b = jax.block_until_ready(out_b)
    ref_b = jnp.maximum(x1b @ w1 + b1 + x2b @ w2 + b2, 0.0)
    assert out_b.shape == (Bb, dim4)
    assert jnp.allclose(out_b, ref_b, atol=1e-5, rtol=1e-5)

    print("KERNEL_OK")
</pallas_src>

<mosaic_0001>
module attributes {stable_mosaic.version = 11 : i64} {
  func.func @merge_kernel(%arg0: memref<8x32xf32, #tpu.memory_space<vmem>>, %arg1: memref<8x48xf32, #tpu.memory_space<vmem>>, %arg2: memref<32x64xf32, #tpu.memory_space<vmem>>, %arg3: memref<48x64xf32, #tpu.memory_space<vmem>>, %arg4: memref<1x64xf32, #tpu.memory_space<vmem>>, %arg5: memref<8x64xf32, #tpu.memory_space<vmem>>) attributes {dimension_semantics = [], scalar_prefetch = 0 : i64, scratch_operands = 0 : i64, tpu.core_type = #tpu.core_type<tc>} {
    %c0 = arith.constant 0 : index
    %c0_0 = arith.constant 0 : index
    %0 = vector.load %arg0[%c0, %c0_0] : memref<8x32xf32, #tpu.memory_space<vmem>>, vector<8x32xf32>
    %c0_1 = arith.constant 0 : index
    %c0_2 = arith.constant 0 : index
    %1 = vector.load %arg2[%c0_1, %c0_2] : memref<32x64xf32, #tpu.memory_space<vmem>>, vector<32x64xf32>
    %cst = arith.constant dense<0.000000e+00> : vector<8x64xf32>
    %2 = tpu.matmul %0, %1, %cst {dimension_numbers = #tpu.dot_dimension_numbers<[1], [0], [0], [1], [0, 0, 1, 1], [], []>, precision = #tpu.contract_precision<fp32>} : vector<8x32xf32>, vector<32x64xf32>, vector<8x64xf32> -> vector<8x64xf32>
    %c0_3 = arith.constant 0 : index
    %c0_4 = arith.constant 0 : index
    %3 = vector.load %arg1[%c0_3, %c0_4] : memref<8x48xf32, #tpu.memory_space<vmem>>, vector<8x48xf32>
    %c0_5 = arith.constant 0 : index
    %c0_6 = arith.constant 0 : index
    %4 = vector.load %arg3[%c0_5, %c0_6] : memref<48x64xf32, #tpu.memory_space<vmem>>, vector<48x64xf32>
    %cst_7 = arith.constant dense<0.000000e+00> : vector<8x64xf32>
    %5 = tpu.matmul %3, %4, %cst_7 {dimension_numbers = #tpu.dot_dimension_numbers<[1], [0], [0], [1], [0, 0, 1, 1], [], []>, precision = #tpu.contract_precision<fp32>} : vector<8x48xf32>, vector<48x64xf32>, vector<8x64xf32> -> vector<8x64xf32>
    %6 = arith.addf %2, %5 : vector<8x64xf32>
    %c0_8 = arith.constant 0 : index
    %c0_9 = arith.constant 0 : index
    %7 = vector.load %arg4[%c0_8, %c0_9] : memref<1x64xf32, #tpu.memory_space<vmem>>, vector<1x64xf32>
    %8 = vector.broadcast %7 : vector<1x64xf32> to vector<8x64xf32>
    %9 = arith.addf %6, %8 : vector<8x64xf32>
    %cst_10 = arith.constant 0.000000e+00 : f32
    %10 = vector.broadcast %cst_10 : f32 to vector<8x64xf32>
    %11 = arith.maximumf %9, %10 : vector<8x64xf32>
    %c0_11 = arith.constant 0 : index
    %c0_12 = arith.constant 0 : index
    %12 = vector.load %arg5[%c0_11, %c0_12] : memref<8x64xf32, #tpu.memory_space<vmem>>, vector<8x64xf32>
    tpu.vector_store %arg5[%c0_11, %c0_12], %11 {strides = array<i32>} : memref<8x64xf32, #tpu.memory_space<vmem>>, vector<8x64xf32>,
    return
  }
}

</mosaic_0001>

<llo_original>
// kernel: tpu_custom_call.1
$region0: #{tpu_custom_call.1}
  #allocation0 [shape = 'u32[]', space=smem, size = 0x4, offset = 0x4, fixed_abs, tag = 'smem constant byte address 0x4 - core index']
  #allocation1 [shape = 'u32[144,128]{1,0:T(1,128)}', space=vmem, size = 0x12000, scoped, tag = 'internal scratch']
  %s0 = inlined_call_operand.hbm [shape: f32[8,32], index: 0, kind: input, shape index: {}]
  %s1 = inlined_call_operand.hbm [shape: f32[8,48], index: 1, kind: input, shape index: {}]
  %s2 = inlined_call_operand.hbm [shape: f32[32,64], index: 2, kind: input, shape index: {}]
  %s3 = inlined_call_operand.hbm [shape: f32[48,64], index: 3, kind: input, shape index: {}]
  %s4 = inlined_call_operand.vmem [shape: f32[1,64], index: 4, kind: input, shape index: {}]
  %s5 = inlined_call_operand.hbm [shape: f32[8,64], index: 5, kind: output, shape index: {}]
  %s6 = sld [smem:[#allocation0]]
  $region46: #{tpu_custom_call.1} parent=0
    _
  %s8 = ssub.s32 1, %s6
  %s9 = scalar_select 0, %s8, %s6
  $region1: #{tpu_custom_call.1} parent=0
    #allocation2 [shape = 'u8[4096]{0}', space=vmem, size = 0x1000, scoped, tag = 'input window, operand 0, single buffered']
    #allocation3 [shape = 's32[1]{0}', space=sflag, size = 0x4, scoped, tag = 'scoped memory for tpu_custom_call.1']
    #allocation4 [shape = 's32[1]{0}', space=sflag, size = 0x4, scoped, tag = 'scoped memory for tpu_custom_call.1']
    #allocation5 [shape = 'u8[4096]{0}', space=vmem, size = 0x1000, scoped, tag = 'input window, operand 1, single buffered']
    #allocation6 [shape = 's32[1]{0}', space=sflag, size = 0x4, scoped, tag = 'scoped memory for tpu_custom_call.1']
    #allocation7 [shape = 'u8[16384]{0}', space=vmem, size = 0x4000, scoped, tag = 'input window, operand 2, single buffered']
    #allocation8 [shape = 'u8[24576]{0}', space=vmem, size = 0x6000, scoped, tag = 'input window, operand 3, single buffered']
    #allocation9 [shape = 's32[1]{0}', space=sflag, size = 0x4, scoped, tag = 'scoped memory for tpu_custom_call.1']
    #allocation10 [shape = 'u8[4096]{0}', space=vmem, size = 0x1000, scoped, tag = 'output window, operand 0, single buffered']
    %10 = vsyncpa [#allocation3], 0
    %11 = vsyncpa [#allocation6], 0
    %12 = vsyncpa [#allocation9], 0
    %13 = vsyncpa [#allocation4], 0
    // Predicated region
    $region2: #{tpu_custom_call.1} parent=1 // pred_check
      _
    $region3: #{tpu_custom_call.1} parent=1 // pred_check_branch
      %15 = sbr.rel (0) target = $region5
    $region4: #{tpu_custom_call.1} parent=1 // pred_region
      %s17 = ssub.s32 128, 128
      %18 = vsyncadd [#allocation3], %s17
      %s20 = sshll.u32 [#allocation2], 4
      %s21 = int_to_ptr.vmem [resolvable:$true] %s20
      %23 = dma.hbm_to_vmem [thread:$0]  %s0, 128, %s21, [#allocation3]
    $region5: #{tpu_custom_call.1} parent=1 // pred_fallthru
      _
    // Predicated region
    $region6: #{tpu_custom_call.1} parent=1 // pred_check
      _
    $region7: #{tpu_custom_call.1} parent=1 // pred_check_branch
      %25 = sbr.rel (0) target = $region9
    $region8: #{tpu_custom_call.1} parent=1 // pred_region
      %s27 = ssub.s32 128, 128
      %28 = vsyncadd [#allocation6], %s27
      %s30 = sshll.u32 [#allocation5], 4
      %s31 = int_to_ptr.vmem [resolvable:$true] %s30
      %33 = dma.hbm_to_vmem [thread:$0]  %s1, 128, %s31, [#allocation6]
    $region9: #{tpu_custom_call.1} parent=1 // pred_fallthru
      _
    // Predicated region
    $region10: #{tpu_custom_call.1} parent=1 // pred_check
      _
    $region11: #{tpu_custom_call.1} parent=1 // pred_check_branch
      %35 = sbr.rel (0) target = $region13
    $region12: #{tpu_custom_call.1} parent=1 // pred_region
      %s37 = ssub.s32 512, 512
      %38 = vsyncadd [#allocation6], %s37
      %s39 = sshll.u32 [#allocation7], 4
      %s40 = int_to_ptr.vmem [resolvable:$true] %s39
      %45 = dma.hbm_to_vmem [thread:$0]  %s2, 512, %s40, [#allocation6], 128, 128, 8
    $region13: #{tpu_custom_call.1} parent=1 // pred_fallthru
      _
    // Predicated region
    $region14: #{tpu_custom_call.1} parent=1 // pred_check
      _
    $region15: #{tpu_custom_call.1} parent=1 // pred_check_branch
      %47 = sbr.rel (0) target = $region17
    $region16: #{tpu_custom_call.1} parent=1 // pred_region
      %s49 = ssub.s32 768, 768
      %50 = vsyncadd [#allocation9], %s49
      %s51 = sshll.u32 [#allocation8], 4
      %s52 = int_to_ptr.vmem [resolvable:$true] %s51
      %57 = dma.hbm_to_vmem [thread:$0]  %s3, 768, %s52, [#allocation9], 128, 128, 8
    $region17: #{tpu_custom_call.1} parent=1 // pred_fallthru
      _
    // Predicated region
    $region18: #{tpu_custom_call.1} parent=1 // pred_check
      _
    $region19: #{tpu_custom_call.1} parent=1 // pred_check_branch
      %59 = sbr.rel (0) target = $region21
    $region20: #{tpu_custom_call.1} parent=1 // pred_region
      _
    $region21: #{tpu_custom_call.1} parent=1 // pred_fallthru
      _
    // Predicated region
    $region22: #{tpu_custom_call.1} parent=1 // pred_check
      _
    $region23: #{tpu_custom_call.1} parent=1 // pred_check_branch
      %61 = sbr.rel (0) target = $region25
    $region24: #{tpu_custom_call.1} parent=1 // pred_region
      %62 = dma.done [#allocation3], 128
    $region25: #{tpu_custom_call.1} parent=1 // pred_fallthru
      _
    // Predicated region
    $region26: #{tpu_custom_call.1} parent=1 // pred_check
      _
    $region27: #{tpu_custom_call.1} parent=1 // pred_check_branch
      %64 = sbr.rel (0) target = $region29
    $region28: #{tpu_custom_call.1} parent=1 // pred_region
      %65 = dma.done [#allocation6], 128
    $region29: #{tpu_custom_call.1} parent=1 // pred_fallthru
      _
    // Predicated region
    $region30: #{tpu_custom_call.1} parent=1 // pred_check
      _
    $region31: #{tpu_custom_call.1} parent=1 // pred_check_branch
      %67 = sbr.rel (0) target = $region33
    $region32: #{tpu_custom_call.1} parent=1 // pred_region
      %68 = dma.done [#allocation6], 512
    $region33: #{tpu_custom_call.1} parent=1 // pred_fallthru
      _
    // Predicated region
    $region34: #{tpu_custom_call.1} parent=1 // pred_check
      _
    $region35: #{tpu_custom_call.1} parent=1 // pred_check_branch
      %70 = sbr.rel (0) target = $region37
    $region36: #{tpu_custom_call.1} parent=1 // pred_region
      %71 = dma.done [#allocation9], 768
    $region37: #{tpu_custom_call.1} parent=1 // pred_fallthru
      _
    %v72 = vld [vmem:[#allocation2] sm:$0xff]
    %v73 = vld [vmem:[#allocation7] sm:$0xff]
    %v74 = vld [vmem:[#allocation7 + $0x8] sm:$0xff]
    %v75 = vld [vmem:[#allocation7 + $0x10] sm:$0xff]
    %v76 = vld [vmem:[#allocation7 + $0x18] sm:$0xff]
    %v77 = vld [vmem:[#allocation5] sm:$0xff]
    %v78 = vld [vmem:[#allocation8] sm:$0xff]
    %v79 = vld [vmem:[#allocation8 + $0x8] sm:$0xff]
    %v80 = vld [vmem:[#allocation8 + $0x10] sm:$0xff]
    %v81 = vld [vmem:[#allocation8 + $0x18] sm:$0xff]
    %v82 = vld [vmem:[#allocation8 + $0x20] sm:$0xff]
    %v83 = vld [vmem:[#allocation8 + $0x28] sm:$0xff]
    %vm84 = vcmask 392192
    %v86 = vsel %vm84, %v77, 0
    %88 = vmatprep.subr.mxu0 0.0
    %v89 = vand.u32 %v78, 4294901760
    %90 = vmatpush1.msra.mxu0 %v89
    %91 = vmatprep.subr.mxu0 0.0
    %v92 = vand.u32 %v79, 4294901760
    %93 = vmatpush1.msra.mxu0 %v92
    %94 = vmatprep.subr.mxu0 0.0
    %v95 = vand.u32 %v80, 4294901760
    %96 = vmatpush1.msra.mxu0 %v95
    %97 = vmatprep.subr.mxu0 0.0
    %v98 = vand.u32 %v81, 4294901760
    %99 = vmatpush1.msra.mxu0 %v98
    %100 = vmatprep.subr.mxu0 0.0
    %v101 = vand.u32 %v82, 4294901760
    %102 = vmatpush1.msra.mxu0 %v101
    %103 = vmatprep.subr.mxu0 0.0
    %v104 = vand.u32 %v83, 4294901760
    %105 = vmatpush1.msra.mxu0 %v104
    %106 = vmatprep.subr.mxu0 0.0
    %107 = vmatpush1.msra.mxu0 0.0
    %108 = vmatprep.subr.mxu0 0.0
    %109 = vmatpush1.msra.mxu0 0.0
    %110 = vmatprep.subr.mxu0 0.0
    %111 = vmatpush1.msra.mxu0 0.0
    %112 = vmatprep.subr.mxu0 0.0
    %113 = vmatpush1.msra.mxu0 0.0
    %114 = vmatprep.subr.mxu0 0.0
    %115 = vmatpush1.msra.mxu0 0.0
    %116 = vmatprep.subr.mxu0 0.0
    %117 = vmatpush1.msra.mxu0 0.0
    %118 = vmatprep.subr.mxu0 0.0
    %119 = vmatpush1.msra.mxu0 0.0
    %120 = vmatprep.subr.mxu0 0.0
    %121 = vmatpush1.msra.mxu0 0.0
    %122 = vmatprep.subr.mxu0 0.0
    %123 = vmatpush1.msra.mxu0 0.0
    %124 = vmatprep.subr.mxu0 0.0
    %125 = vmatpush1.msra.mxu0 0.0
    %126 = vmatprep.subr.mxu0 0.0
    %127 = vmatpush1.msra.mxu0 0.0
    %128 = vmatprep.subr.mxu0 0.0
    %129 = vmatpush1.msra.mxu0 0.0
    %130 = vmatprep.subr.mxu0 0.0
    %131 = vmatpush1.msra.mxu0 0.0
    %132 = vmatprep.subr.mxu0 0.0
    %133 = vmatpush1.msra.mxu0 0.0
    %134 = vmatprep.subr.mxu0 0.0
    %135 = vmatpush1.msra.mxu0 0.0
    %136 = vmatprep.subr.mxu0 0.0
    %137 = vmatpush1.msra.mxu0 0.0
    %138 = vmatprep.subr.mxu0 0.0
    %139 = vmatpush1.msra.mxu0 0.0
    %140 = vmatprep.subr.mxu0 0.0
    %141 = vmatpush1.msra.mxu0 0.0
    %142 = vmatprep.subr.mxu0 0.0
    %143 = vmatpush1.msra.mxu0 0.0
    %144 = vmatprep.subr.mxu0 0.0
    %145 = vmatpush1.msra.mxu0 0.0
    %146 = vmatprep.subr.mxu0 0.0
    %147 = vmatpush1.msra.mxu0 0.0
    %148 = vmatprep.subr.mxu0 0.0
    %149 = vmatpush1.msra.mxu0 0.0
    %150 = vmatprep.subr.mxu0 0.0
    %151 = vmatpush1.msra.mxu0 0.0
    %152 = vmatprep.subr.mxu0 0.0
    %153 = vmatpush1.msra.mxu0 0.0
    %154 = vmatprep.subr.mxu0 0.0
    %155 = vmatpush1.msra.mxu0 0.0
    %156 = vmatprep.subr.mxu0 0.0
    %157 = vmatpush1.msra.mxu0 0.0
    %158 = vmatprep.mubr.f32.mxu0 0.0
    %v159 = vand.u32 %v86, 4294901760
    %v160 = vsub.f32 %v86, %v159
    %v161 = vand.u32 %v160, 4294901760
    %v162 = vsub.f32 %v160, %v161
    %v163 = vand.u32 %v162, 4294901760
    %164 = vmatmul.mubr.f32.gmra.mrb[0].mxu0 %v163
    %v165 = vpop.f32.mrb[0].mxu0
    %v166 = vadd.f32 0.0, %v165
    %v167 = vpop.f32.mrb[0].mxu0
    %168 = vdwg.mxu0
    %169 = vmatprep.subr.mxu0 0.0
    %v170 = vand.u32 %v78, 4294901760
    %v171 = vsub.f32 %v78, %v170
    %v172 = vand.u32 %v171, 4294901760
    %v173 = vsub.f32 %v171, %v172
    %v174 = vand.u32 %v173, 4294901760
    %175 = vmatpush1.msra.mxu0 %v174
    %176 = vmatprep.subr.mxu0 0.0
    %v177 = vand.u32 %v79, 4294901760
    %v178 = vsub.f32 %v79, %v177
    %v179 = vand.u32 %v178, 4294901760
    %v180 = vsub.f32 %v178, %v179
    %v181 = vand.u32 %v180, 4294901760
    %182 = vmatpush1.msra.mxu0 %v181
    %183 = vmatprep.subr.mxu0 0.0
    %v184 = vand.u32 %v80, 4294901760
    %v185 = vsub.f32 %v80, %v184
    %v186 = vand.u32 %v185, 4294901760
    %v187 = vsub.f32 %v185, %v186
    %v188 = vand.u32 %v187, 4294901760
    %189 = vmatpush1.msra.mxu0 %v188
    %190 = vmatprep.subr.mxu0 0.0
    %v191 = vand.u32 %v81, 4294901760
    %v192 = vsub.f32 %v81, %v191
    %v193 = vand.u32 %v192, 4294901760
    %v194 = vsub.f32 %v192, %v193
    %v195 = vand.u32 %v194, 4294901760
    %196 = vmatpush1.msra.mxu0 %v195
    %197 = vmatprep.subr.mxu0 0.0
    %v198 = vand.u32 %v82, 4294901760
    %v199 = vsub.f32 %v82, %v198
    %v200 = vand.u32 %v199, 4294901760
    %v201 = vsub.f32 %v199, %v200
    %v202 = vand.u32 %v201, 4294901760
    %203 = vmatpush1.msra.mxu0 %v202
    %204 = vmatprep.subr.mxu0 0.0
    %v205 = vand.u32 %v83, 4294901760
    %v206 = vsub.f32 %v83, %v205
    %v207 = vand.u32 %v206, 4294901760
    %v208 = vsub.f32 %v206, %v207
    %v209 = vand.u32 %v208, 4294901760
    %210 = vmatpush1.msra.mxu0 %v209
    %211 = vmatprep.subr.mxu0 0.0
    %212 = vmatpush1.msra.mxu0 0.0
    %213 = vmatprep.subr.mxu0 0.0
    %214 = vmatpush1.msra.mxu0 0.0
    %215 = vmatprep.subr.mxu0 0.0
    %216 = vmatpush1.msra.mxu0 0.0
    %217 = vmatprep.subr.mxu0 0.0
    %218 = vmatpush1.msra.mxu0 0.0
    %219 = vmatprep.subr.mxu0 0.0
    %220 = vmatpush1.msra.mxu0 0.0
    %221 = vmatprep.subr.mxu0 0.0
    %222 = vmatpush1.msra.mxu0 0.0
    %223 = vmatprep.subr.mxu0 0.0
    %224 = vmatpush1.msra.mxu0 0.0
    %225 = vmatprep.subr.mxu0 0.0
    %226 = vmatpush1.msra.mxu0 0.0
    %227 = vmatprep.subr.mxu0 0.0
    %228 = vmatpush1.msra.mxu0 0.0
    %229 = vmatprep.subr.mxu0 0.0
    %230 = vmatpush1.msra.mxu0 0.0
    %231 = vmatprep.subr.mxu0 0.0
    %232 = vmatpush1.msra.mxu0 0.0
    %233 = vmatprep.subr.mxu0 0.0
    %234 = vmatpush1.msra.mxu0 0.0
    %235 = vmatprep.subr.mxu0 0.0
    %236 = vmatpush1.msra.mxu0 0.0
    %237 = vmatprep.subr.mxu0 0.0
    %238 = vmatpush1.msra.mxu0 0.0
    %239 = vmatprep.subr.mxu0 0.0
    %240 = vmatpush1.msra.mxu0 0.0
    %241 = vmatprep.subr.mxu0 0.0
    %242 = vmatpush1.msra.mxu0 0.0
    %243 = vmatprep.subr.mxu0 0.0
    %244 = vmatpush1.msra.mxu0 0.0
    %245 = vmatprep.subr.mxu0 0.0
    %246 = vmatpush1.msra.mxu0 0.0
    %247 = vmatprep.subr.mxu0 0.0
    %248 = vmatpush1.msra.mxu0 0.0
    %249 = vmatprep.subr.mxu0 0.0
    %250 = vmatpush1.msra.mxu0 0.0
    %251 = vmatprep.subr.mxu0 0.0
    %252 = vmatpush1.msra.mxu0 0.0
    %253 = vmatprep.subr.mxu0 0.0
    %254 = vmatpush1.msra.mxu0 0.0
    %255 = vmatprep.subr.mxu0 0.0
    %256 = vmatpush1.msra.mxu0 0.0
    %257 = vmatprep.subr.mxu0 0.0
    %258 = vmatpush1.msra.mxu0 0.0
    %259 = vmatprep.subr.mxu0 0.0
    %260 = vmatpush1.msra.mxu0 0.0
    %261 = vmatprep.subr.mxu0 0.0
    %262 = vmatpush1.msra.mxu0 0.0
    %263 = vmatprep.mubr.f32.mxu0 0.0
    %v264 = vand.u32 %v86, 4294901760
    %265 = vmatmul.mubr.f32.gmra.mrb[0].mxu0 %v264
    %v266 = vpop.f32.mrb[0].mxu0
    %v267 = vadd.f32 %v166, %v266
    %v268 = vpop.f32.mrb[0].mxu0
    %269 = vdwg.mxu0
    %270 = vmatprep.subr.mxu0 0.0
    %v271 = vand.u32 %v78, 4294901760
    %v272 = vsub.f32 %v78, %v271
    %273 = vmatpush1.msra.mxu0 %v272
    %274 = vmatprep.subr.mxu0 0.0
    %v275 = vand.u32 %v79, 4294901760
    %v276 = vsub.f32 %v79, %v275
    %277 = vmatpush1.msra.mxu0 %v276
    %278 = vmatprep.subr.mxu0 0.0
    %v279 = vand.u32 %v80, 4294901760
    %v280 = vsub.f32 %v80, %v279
    %281 = vmatpush1.msra.mxu0 %v280
    %282 = vmatprep.subr.mxu0 0.0
    %v283 = vand.u32 %v81, 4294901760
    %v284 = vsub.f32 %v81, %v283
    %285 = vmatpush1.msra.mxu0 %v284
    %286 = vmatprep.subr.mxu0 0.0
    %v287 = vand.u32 %v82, 4294901760
    %v288 = vsub.f32 %v82, %v287
    %289 = vmatpush1.msra.mxu0 %v288
    %290 = vmatprep.subr.mxu0 0.0
    %v291 = vand.u32 %v83, 4294901760
    %v292 = vsub.f32 %v83, %v291
    %293 = vmatpush1.msra.mxu0 %v292
    %294 = vmatprep.subr.mxu0 0.0
    %295 = vmatpush1.msra.mxu0 0.0
    %296 = vmatprep.subr.mxu0 0.0
    %297 = vmatpush1.msra.mxu0 0.0
    %298 = vmatprep.subr.mxu0 0.0
    %299 = vmatpush1.msra.mxu0 0.0
    %300 = vmatprep.subr.mxu0 0.0
    %301 = vmatpush1.msra.mxu0 0.0
    %302 = vmatprep.subr.mxu0 0.0
    %303 = vmatpush1.msra.mxu0 0.0
    %304 = vmatprep.subr.mxu0 0.0
    %305 = vmatpush1.msra.mxu0 0.0
    %306 = vmatprep.subr.mxu0 0.0
    %307 = vmatpush1.msra.mxu0 0.0
    %308 = vmatprep.subr.mxu0 0.0
    %309 = vmatpush1.msra.mxu0 0.0
    %310 = vmatprep.subr.mxu0 0.0
    %311 = vmatpush1.msra.mxu0 0.0
    %312 = vmatprep.subr.mxu0 0.0
    %313 = vmatpush1.msra.mxu0 0.0
    %314 = vmatprep.subr.mxu0 0.0
    %315 = vmatpush1.msra.mxu0 0.0
    %316 = vmatprep.subr.mxu0 0.0
    %317 = vmatpush1.msra.mxu0 0.0
    %318 = vmatprep.subr.mxu0 0.0
    %319 = vmatpush1.msra.mxu0 0.0
    %320 = vmatprep.subr.mxu0 0.0
    %321 = vmatpush1.msra.mxu0 0.0
    %322 = vmatprep.subr.mxu0 0.0
    %323 = vmatpush1.msra.mxu0 0.0
    %324 = vmatprep.subr.mxu0 0.0
    %325 = vmatpush1.msra.mxu0 0.0
    %326 = vmatprep.subr.mxu0 0.0
    %327 = vmatpush1.msra.mxu0 0.0
    %328 = vmatprep.subr.mxu0 0.0
    %329 = vmatpush1.msra.mxu0 0.0
    %330 = vmatprep.subr.mxu0 0.0
    %331 = vmatpush1.msra.mxu0 0.0
    %332 = vmatprep.subr.mxu0 0.0
    %333 = vmatpush1.msra.mxu0 0.0
    %334 = vmatprep.subr.mxu0 0.0
    %335 = vmatpush1.msra.mxu0 0.0
    %336 = vmatprep.subr.mxu0 0.0
    %337 = vmatpush1.msra.mxu0 0.0
    %338 = vmatprep.subr.mxu0 0.0
    %339 = vmatpush1.msra.mxu0 0.0
    %340 = vmatprep.subr.mxu0 0.0
    %341 = vmatpush1.msra.mxu0 0.0
    %342 = vmatprep.subr.mxu0 0.0
    %343 = vmatpush1.msra.mxu0 0.0
    %344 = vmatprep.subr.mxu0 0.0
    %345 = vmatpush1.msra.mxu0 0.0
    %346 = vmatprep.mubr.f32.mxu0 0.0
    %v347 = vand.u32 %v86, 4294901760
    %v348 = vsub.f32 %v86, %v347
    %349 = vmatmul.mubr.f32.gmra.mrb[0].mxu0 %v348
    %v350 = vpop.f32.mrb[0].mxu0
    %v351 = vadd.f32 %v267, %v350
    %v352 = vpop.f32.mrb[0].mxu0
    %353 = vdwg.mxu0
    %354 = vmatprep.subr.mxu0 0.0
    %v355 = vand.u32 %v78, 4294901760
    %356 = vmatpush1.msra.mxu0 %v355
    %357 = vmatprep.subr.mxu0 0.0
    %v358 = vand.u32 %v79, 4294901760
    %359 = vmatpush1.msra.mxu0 %v358
    %360 = vmatprep.subr.mxu0 0.0
    %v361 = vand.u32 %v80, 4294901760
    %362 = vmatpush1.msra.mxu0 %v361
    %363 = vmatprep.subr.mxu0 0.0
    %v364 = vand.u32 %v81, 4294901760
    %365 = vmatpush1.msra.mxu0 %v364
    %366 = vmatprep.subr.mxu0 0.0
    %v367 = vand.u32 %v82, 4294901760
    %368 = vmatpush1.msra.mxu0 %v367
    %369 = vmatprep.subr.mxu0 0.0
    %v370 = vand.u32 %v83, 4294901760
    %371 = vmatpush1.msra.mxu0 %v370
    %372 = vmatprep.subr.mxu0 0.0
    %373 = vmatpush1.msra.mxu0 0.0
    %374 = vmatprep.subr.mxu0 0.0
    %375 = vmatpush1.msra.mxu0 0.0
    %376 = vmatprep.subr.mxu0 0.0
    %377 = vmatpush1.msra.mxu0 0.0
    %378 = vmatprep.subr.mxu0 0.0
    %379 = vmatpush1.msra.mxu0 0.0
    %380 = vmatprep.subr.mxu0 0.0
    %381 = vmatpush1.msra.mxu0 0.0
    %382 = vmatprep.subr.mxu0 0.0
    %383 = vmatpush1.msra.mxu0 0.0
    %384 = vmatprep.subr.mxu0 0.0
    %385 = vmatpush1.msra.mxu0 0.0
    %386 = vmatprep.subr.mxu0 0.0
    %387 = vmatpush1.msra.mxu0 0.0
    %388 = vmatprep.subr.mxu0 0.0
    %389 = vmatpush1.msra.mxu0 0.0
    %390 = vmatprep.subr.mxu0 0.0
    %391 = vmatpush1.msra.mxu0 0.0
    %392 = vmatprep.subr.mxu0 0.0
    %393 = vmatpush1.msra.mxu0 0.0
    %394 = vmatprep.subr.mxu0 0.0
    %395 = vmatpush1.msra.mxu0 0.0
    %396 = vmatprep.subr.mxu0 0.0
    %397 = vmatpush1.msra.mxu0 0.0
    %398 = vmatprep.subr.mxu0 0.0
    %399 = vmatpush1.msra.mxu0 0.0
    %400 = vmatprep.subr.mxu0 0.0
    %401 = vmatpush1.msra.mxu0 0.0
    %402 = vmatprep.subr.mxu0 0.0
    %403 = vmatpush1.msra.mxu0 0.0
    %404 = vmatprep.subr.mxu0 0.0
    %405 = vmatpush1.msra.mxu0 0.0
    %406 = vmatprep.subr.mxu0 0.0
    %407 = vmatpush1.msra.mxu0 0.0
    %408 = vmatprep.subr.mxu0 0.0
    %409 = vmatpush1.msra.mxu0 0.0
    %410 = vmatprep.subr.mxu0 0.0
    %411 = vmatpush1.msra.mxu0 0.0
    %412 = vmatprep.subr.mxu0 0.0
    %413 = vmatpush1.msra.mxu0 0.0
    %414 = vmatprep.subr.mxu0 0.0
    %415 = vmatpush1.msra.mxu0 0.0
    %416 = vmatprep.subr.mxu0 0.0
    %417 = vmatpush1.msra.mxu0 0.0
    %418 = vmatprep.subr.mxu0 0.0
    %419 = vmatpush1.msra.mxu0 0.0
    %420 = vmatprep.subr.mxu0 0.0
    %421 = vmatpush1.msra.mxu0 0.0
    %422 = vmatprep.subr.mxu0 0.0
    %423 = vmatpush1.msra.mxu0 0.0
    %424 = vmatprep.mubr.f32.mxu0 0.0
    %v425 = vand.u32 %v86, 4294901760
    %v426 = vsub.f32 %v86, %v425
    %v427 = vand.u32 %v426, 4294901760
    %428 = vmatmul.mubr.f32.gmra.mrb[0].mxu0 %v427
    %v429 = vpop.f32.mrb[0].mxu0
    %v430 = vadd.f32 %v351, %v429
    %v431 = vpop.f32.mrb[0].mxu0
    %432 = vdwg.mxu0
    %433 = vmatprep.subr.mxu0 0.0
    %v434 = vand.u32 %v78, 4294901760
    %v435 = vsub.f32 %v78, %v434
    %v436 = vand.u32 %v435, 4294901760
    %437 = vmatpush1.msra.mxu0 %v436
    %438 = vmatprep.subr.mxu0 0.0
    %v439 = vand.u32 %v79, 4294901760
    %v440 = vsub.f32 %v79, %v439
    %v441 = vand.u32 %v440, 4294901760
    %442 = vmatpush1.msra.mxu0 %v441
    %443 = vmatprep.subr.mxu0 0.0
    %v444 = vand.u32 %v80, 4294901760
    %v445 = vsub.f32 %v80, %v444
    %v446 = vand.u32 %v445, 4294901760
    %447 = vmatpush1.msra.mxu0 %v446
    %448 = vmatprep.subr.mxu0 0.0
    %v449 = vand.u32 %v81, 4294901760
    %v450 = vsub.f32 %v81, %v449
    %v451 = vand.u32 %v450, 4294901760
    %452 = vmatpush1.msra.mxu0 %v451
    %453 = vmatprep.subr.mxu0 0.0
    %v454 = vand.u32 %v82, 4294901760
    %v455 = vsub.f32 %v82, %v454
    %v456 = vand.u32 %v455, 4294901760
    %457 = vmatpush1.msra.mxu0 %v456
    %458 = vmatprep.subr.mxu0 0.0
    %v459 = vand.u32 %v83, 4294901760
    %v460 = vsub.f32 %v83, %v459
    %v461 = vand.u32 %v460, 4294901760
    %462 = vmatpush1.msra.mxu0 %v461
    %463 = vmatprep.subr.mxu0 0.0
    %464 = vmatpush1.msra.mxu0 0.0
    %465 = vmatprep.subr.mxu0 0.0
    %466 = vmatpush1.msra.mxu0 0.0
    %467 = vmatprep.subr.mxu0 0.0
    %468 = vmatpush1.msra.mxu0 0.0
    %469 = vmatprep.subr.mxu0 0.0
    %470 = vmatpush1.msra.mxu0 0.0
    %471 = vmatprep.subr.mxu0 0.0
    %472 = vmatpush1.msra.mxu0 0.0
    %473 = vmatprep.subr.mxu0 0.0
    %474 = vmatpush1.msra.mxu0 0.0
    %475 = vmatprep.subr.mxu0 0.0
    %476 = vmatpush1.msra.mxu0 0.0
    %477 = vmatprep.subr.mxu0 0.0
    %478 = vmatpush1.msra.mxu0 0.0
    %479 = vmatprep.subr.mxu0 0.0
    %480 = vmatpush1.msra.mxu0 0.0
    %481 = vmatprep.subr.mxu0 0.0
    %482 = vmatpush1.msra.mxu0 0.0
    %483 = vmatprep.subr.mxu0 0.0
    %484 = vmatpush1.msra.mxu0 0.0
    %485 = vmatprep.subr.mxu0 0.0
    %486 = vmatpush1.msra.mxu0 0.0
    %487 = vmatprep.subr.mxu0 0.0
    %488 = vmatpush1.msra.mxu0 0.0
    %489 = vmatprep.subr.mxu0 0.0
    %490 = vmatpush1.msra.mxu0 0.0
    %491 = vmatprep.subr.mxu0 0.0
    %492 = vmatpush1.msra.mxu0 0.0
    %493 = vmatprep.subr.mxu0 0.0
    %494 = vmatpush1.msra.mxu0 0.0
    %495 = vmatprep.subr.mxu0 0.0
    %496 = vmatpush1.msra.mxu0 0.0
    %497 = vmatprep.subr.mxu0 0.0
    %498 = vmatpush1.msra.mxu0 0.0
    %499 = vmatprep.subr.mxu0 0.0
    %500 = vmatpush1.msra.mxu0 0.0
    %501 = vmatprep.subr.mxu0 0.0
    %502 = vmatpush1.msra.mxu0 0.0
    %503 = vmatprep.subr.mxu0 0.0
    %504 = vmatpush1.msra.mxu0 0.0
    %505 = vmatprep.subr.mxu0 0.0
    %506 = vmatpush1.msra.mxu0 0.0
    %507 = vmatprep.subr.mxu0 0.0
    %508 = vmatpush1.msra.mxu0 0.0
    %509 = vmatprep.subr.mxu0 0.0
    %510 = vmatpush1.msra.mxu0 0.0
    %511 = vmatprep.subr.mxu0 0.0
    %512 = vmatpush1.msra.mxu0 0.0
    %513 = vmatprep.subr.mxu0 0.0
    %514 = vmatpush1.msra.mxu0 0.0
    %515 = vmatprep.mubr.f32.mxu0 0.0
    %v516 = vand.u32 %v86, 4294901760
    %517 = vmatmul.mubr.f32.gmra.mrb[0].mxu0 %v516
    %v518 = vpop.f32.mrb[0].mxu0
    %v519 = vadd.f32 %v430, %v518
    %v520 = vpop.f32.mrb[0].mxu0
    %521 = vdwg.mxu0
    %522 = vmatprep.subr.mxu0 0.0
    %v523 = vand.u32 %v78, 4294901760
    %524 = vmatpush1.msra.mxu0 %v523
    %525 = vmatprep.subr.mxu0 0.0
    %v526 = vand.u32 %v79, 4294901760
    %527 = vmatpush1.msra.mxu0 %v526
    %528 = vmatprep.subr.mxu0 0.0
    %v529 = vand.u32 %v80, 4294901760
    %530 = vmatpush1.msra.mxu0 %v529
    %531 = vmatprep.subr.mxu0 0.0
    %v532 = vand.u32 %v81, 4294901760
    %533 = vmatpush1.msra.mxu0 %v532
    %534 = vmatprep.subr.mxu0 0.0
    %v535 = vand.u32 %v82, 4294901760
    %536 = vmatpush1.msra.mxu0 %v535
    %537 = vmatprep.subr.mxu0 0.0
    %v538 = vand.u32 %v83, 4294901760
    %539 = vmatpush1.msra.mxu0 %v538
    %540 = vmatprep.subr.mxu0 0.0
    %541 = vmatpush1.msra.mxu0 0.0
    %542 = vmatprep.subr.mxu0 0.0
    %543 = vmatpush1.msra.mxu0 0.0
    %544 = vmatprep.subr.mxu0 0.0
    %545 = vmatpush1.msra.mxu0 0.0
    %546 = vmatprep.subr.mxu0 0.0
    %547 = vmatpush1.msra.mxu0 0.0
    %548 = vmatprep.subr.mxu0 0.0
    %549 = vmatpush1.msra.mxu0 0.0
    %550 = vmatprep.subr.mxu0 0.0
    %551 = vmatpush1.msra.mxu0 0.0
    %552 = vmatprep.subr.mxu0 0.0
    %553 = vmatpush1.msra.mxu0 0.0
    %554 = vmatprep.subr.mxu0 0.0
    %555 = vmatpush1.msra.mxu0 0.0
    %556 = vmatprep.subr.mxu0 0.0
    %557 = vmatpush1.msra.mxu0 0.0
    %558 = vmatprep.subr.mxu0 0.0
    %559 = vmatpush1.msra.mxu0 0.0
    %560 = vmatprep.subr.mxu0 0.0
    %561 = vmatpush1.msra.mxu0 0.0
    %562 = vmatprep.subr.mxu0 0.0
    %563 = vmatpush1.msra.mxu0 0.0
    %564 = vmatprep.subr.mxu0 0.0
    %565 = vmatpush1.msra.mxu0 0.0
    %566 = vmatprep.subr.mxu0 0.0
    %567 = vmatpush1.msra.mxu0 0.0
    %568 = vmatprep.subr.mxu0 0.0
    %569 = vmatpush1.msra.mxu0 0.0
    %570 = vmatprep.subr.mxu0 0.0
    %571 = vmatpush1.msra.mxu0 0.0
    %572 = vmatprep.subr.mxu0 0.0
    %573 = vmatpush1.msra.mxu0 0.0
    %574 = vmatprep.subr.mxu0 0.0
    %575 = vmatpush1.msra.mxu0 0.0
    %576 = vmatprep.subr.mxu0 0.0
    %577 = vmatpush1.msra.mxu0 0.0
    %578 = vmatprep.subr.mxu0 0.0
    %579 = vmatpush1.msra.mxu0 0.0
    %580 = vmatprep.subr.mxu0 0.0
    %581 = vmatpush1.msra.mxu0 0.0
    %582 = vmatprep.subr.mxu0 0.0
    %583 = vmatpush1.msra.mxu0 0.0
    %584 = vmatprep.subr.mxu0 0.0
    %585 = vmatpush1.msra.mxu0 0.0
    %586 = vmatprep.subr.mxu0 0.0
    %587 = vmatpush1.msra.mxu0 0.0
    %588 = vmatprep.subr.mxu0 0.0
    %589 = vmatpush1.msra.mxu0 0.0
    %590 = vmatprep.subr.mxu0 0.0
    %591 = vmatpush1.msra.mxu0 0.0
    %592 = vmatprep.mubr.f32.mxu0 0.0
    %v593 = vand.u32 %v86, 4294901760
    %594 = vmatmul.mubr.f32.gmra.mrb[0].mxu0 %v593
    %v595 = vpop.f32.mrb[0].mxu0
    %v596 = vadd.f32 %v519, %v595
    %v597 = vpop.f32.mrb[0].mxu0
    %598 = vdwg.mxu0
    %vm599 = vcmask 261120
    %v601 = vsel %vm599, %v72, 0
    %603 = vmatprep.subr.mxu0 0.0
    %v604 = vand.u32 %v73, 4294901760
    %605 = vmatpush1.msra.mxu0 %v604
    %606 = vmatprep.subr.mxu0 0.0
    %v607 = vand.u32 %v74, 4294901760
    %608 = vmatpush1.msra.mxu0 %v607
    %609 = vmatprep.subr.mxu0 0.0
    %v610 = vand.u32 %v75, 4294901760
    %611 = vmatpush1.msra.mxu0 %v610
    %612 = vmatprep.subr.mxu0 0.0
    %v613 = vand.u32 %v76, 4294901760
    %614 = vmatpush1.msra.mxu0 %v613
    %615 = vmatprep.subr.mxu0 0.0
    %616 = vmatpush1.msra.mxu0 0.0
    %617 = vmatprep.subr.mxu0 0.0
    %618 = vmatpush1.msra.mxu0 0.0
    %619 = vmatprep.subr.mxu0 0.0
    %620 = vmatpush1.msra.mxu0 0.0
    %621 = vmatprep.subr.mxu0 0.0
    %622 = vmatpush1.msra.mxu0 0.0
    %623 = vmatprep.subr.mxu0 0.0
    %624 = vmatpush1.msra.mxu0 0.0
    %625 = vmatprep.subr.mxu0 0.0
    %626 = vmatpush1.msra.mxu0 0.0
    %627 = vmatprep.subr.mxu0 0.0
    %628 = vmatpush1.msra.mxu0 0.0
    %629 = vmatprep.subr.mxu0 0.0
    %630 = vmatpush1.msra.mxu0 0.0
    %631 = vmatprep.subr.mxu0 0.0
    %632 = vmatpush1.msra.mxu0 0.0
    %633 = vmatprep.subr.mxu0 0.0
    %634 = vmatpush1.msra.mxu0 0.0
    %635 = vmatprep.subr.mxu0 0.0
    %636 = vmatpush1.msra.mxu0 0.0
    %637 = vmatprep.subr.mxu0 0.0
    %638 = vmatpush1.msra.mxu0 0.0
    %639 = vmatprep.subr.mxu0 0.0
    %640 = vmatpush1.msra.mxu0 0.0
    %641 = vmatprep.subr.mxu0 0.0
    %642 = vmatpush1.msra.mxu0 0.0
    %643 = vmatprep.subr.mxu0 0.0
    %644 = vmatpush1.msra.mxu0 0.0
    %645 = vmatprep.subr.mxu0 0.0
    %646 = vmatpush1.msra.mxu0 0.0
    %647 = vmatprep.subr.mxu0 0.0
    %648 = vmatpush1.msra.mxu0 0.0
    %649 = vmatprep.subr.mxu0 0.0
    %650 = vmatpush1.msra.mxu0 0.0
    %651 = vmatprep.subr.mxu0 0.0
    %652 = vmatpush1.msra.mxu0 0.0
    %653 = vmatprep.subr.mxu0 0.0
    %654 = vmatpush1.msra.mxu0 0.0
    %655 = vmatprep.subr.mxu0 0.0
    %656 = vmatpush1.msra.mxu0 0.0
    %657 = vmatprep.subr.mxu0 0.0
    %658 = vmatpush1.msra.mxu0 0.0
    %659 = vmatprep.subr.mxu0 0.0
    %660 = vmatpush1.msra.mxu0 0.0
    %661 = vmatprep.subr.mxu0 0.0
    %662 = vmatpush1.msra.mxu0 0.0
    %663 = vmatprep.subr.mxu0 0.0
    %664 = vmatpush1.msra.mxu0 0.0
    %665 = vmatprep.subr.mxu0 0.0
    %666 = vmatpush1.msra.mxu0 0.0
    %667 = vmatprep.subr.mxu0 0.0
    %668 = vmatpush1.msra.mxu0 0.0
    %669 = vmatprep.subr.mxu0 0.0
    %670 = vmatpush1.msra.mxu0 0.0
    %671 = vmatprep.mubr.f32.mxu0 0.0
    %v672 = vand.u32 %v601, 4294901760
    %v673 = vsub.f32 %v601, %v672
    %v674 = vand.u32 %v673, 4294901760
    %v675 = vsub.f32 %v673, %v674
    %v676 = vand.u32 %v675, 4294901760
    %677 = vmatmul.mubr.f32.gmra.mrb[0].mxu0 %v676
    %v678 = vpop.f32.mrb[0].mxu0
    %v679 = vadd.f32 %v596, %v678
    %v680 = vpop.f32.mrb[0].mxu0
    %681 = vdwg.mxu0
    %682 = vmatprep.subr.mxu0 0.0
    %v683 = vand.u32 %v73, 4294901760
    %v684 = vsub.f32 %v73, %v683
    %v685 = vand.u32 %v684, 4294901760
    %v686 = vsub.f32 %v684, %v685
    %v687 = vand.u32 %v686, 4294901760
    %688 = vmatpush1.msra.mxu0 %v687
    %689 = vmatprep.subr.mxu0 0.0
    %v690 = vand.u32 %v74, 4294901760
    %v691 = vsub.f32 %v74, %v690
    %v692 = vand.u32 %v691, 4294901760
    %v693 = vsub.f32 %v691, %v692
    %v694 = vand.u32 %v693, 4294901760
    %695 = vmatpush1.msra.mxu0 %v694
    %696 = vmatprep.subr.mxu0 0.0
    %v697 = vand.u32 %v75, 4294901760
    %v698 = vsub.f32 %v75, %v697
    %v699 = vand.u32 %v698, 4294901760
    %v700 = vsub.f32 %v698, %v699
    %v701 = vand.u32 %v700, 4294901760
    %702 = vmatpush1.msra.mxu0 %v701
    %703 = vmatprep.subr.mxu0 0.0
    %v704 = vand.u32 %v76, 4294901760
    %v705 = vsub.f32 %v76, %v704
    %v706 = vand.u32 %v705, 4294901760
    %v707 = vsub.f32 %v705, %v706
    %v708 = vand.u32 %v707, 4294901760
    %709 = vmatpush1.msra.mxu0 %v708
    %710 = vmatprep.subr.mxu0 0.0
    %711 = vmatpush1.msra.mxu0 0.0
    %712 = vmatprep.subr.mxu0 0.0
    %713 = vmatpush1.msra.mxu0 0.0
    %714 = vmatprep.subr.mxu0 0.0
    %715 = vmatpush1.msra.mxu0 0.0
    %716 = vmatprep.subr.mxu0 0.0
    %717 = vmatpush1.msra.mxu0 0.0
    %718 = vmatprep.subr.mxu0 0.0
    %719 = vmatpush1.msra.mxu0 0.0
    %720 = vmatprep.subr.mxu0 0.0
    %721 = vmatpush1.msra.mxu0 0.0
    %722 = vmatprep.subr.mxu0 0.0
    %723 = vmatpush1.msra.mxu0 0.0
    %724 = vmatprep.subr.mxu0 0.0
    %725 = vmatpush1.msra.mxu0 0.0
    %726 = vmatprep.subr.mxu0 0.0
    %727 = vmatpush1.msra.mxu0 0.0
    %728 = vmatprep.subr.mxu0 0.0
    %729 = vmatpush1.msra.mxu0 0.0
    %730 = vmatprep.subr.mxu0 0.0
    %731 = vmatpush1.msra.mxu0 0.0
    %732 = vmatprep.subr.mxu0 0.0
    %733 = vmatpush1.msra.mxu0 0.0
    %734 = vmatprep.subr.mxu0 0.0
    %735 = vmatpush1.msra.mxu0 0.0
    %736 = vmatprep.subr.mxu0 0.0
    %737 = vmatpush1.msra.mxu0 0.0
    %738 = vmatprep.subr.mxu0 0.0
    %739 = vmatpush1.msra.mxu0 0.0
    %740 = vmatprep.subr.mxu0 0.0
    %741 = vmatpush1.msra.mxu0 0.0
    %742 = vmatprep.subr.mxu0 0.0
    %743 = vmatpush1.msra.mxu0 0.0
    %744 = vmatprep.subr.mxu0 0.0
    %745 = vmatpush1.msra.mxu0 0.0
    %746 = vmatprep.subr.mxu0 0.0
    %747 = vmatpush1.msra.mxu0 0.0
    %748 = vmatprep.subr.mxu0 0.0
    %749 = vmatpush1.msra.mxu0 0.0
    %750 = vmatprep.subr.mxu0 0.0
    %751 = vmatpush1.msra.mxu0 0.0
    %752 = vmatprep.subr.mxu0 0.0
    %753 = vmatpush1.msra.mxu0 0.0
    %754 = vmatprep.subr.mxu0 0.0
    %755 = vmatpush1.msra.mxu0 0.0
    %756 = vmatprep.subr.mxu0 0.0
    %757 = vmatpush1.msra.mxu0 0.0
    %758 = vmatprep.subr.mxu0 0.0
    %759 = vmatpush1.msra.mxu0 0.0
    %760 = vmatprep.subr.mxu0 0.0
    %761 = vmatpush1.msra.mxu0 0.0
    %762 = vmatprep.subr.mxu0 0.0
    %763 = vmatpush1.msra.mxu0 0.0
    %764 = vmatprep.subr.mxu0 0.0
    %765 = vmatpush1.msra.mxu0 0.0
    %766 = vmatprep.mubr.f32.mxu0 0.0
    %v767 = vand.u32 %v601, 4294901760
    %768 = vmatmul.mubr.f32.gmra.mrb[0].mxu0 %v767
    %v769 = vpop.f32.mrb[0].mxu0
    %v770 = vadd.f32 %v679, %v769
    %v771 = vpop.f32.mrb[0].mxu0
    %772 = vdwg.mxu0
    %773 = vmatprep.subr.mxu0 0.0
    %v774 = vand.u32 %v73, 4294901760
    %v775 = vsub.f32 %v73, %v774
    %776 = vmatpush1.msra.mxu0 %v775
    %777 = vmatprep.subr.mxu0 0.0
    %v778 = vand.u32 %v74, 4294901760
    %v779 = vsub.f32 %v74, %v778
    %780 = vmatpush1.msra.mxu0 %v779
    %781 = vmatprep.subr.mxu0 0.0
    %v782 = vand.u32 %v75, 4294901760
    %v783 = vsub.f32 %v75, %v782
    %784 = vmatpush1.msra.mxu0 %v783
    %785 = vmatprep.subr.mxu0 0.0
    %v786 = vand.u32 %v76, 4294901760
    %v787 = vsub.f32 %v76, %v786
    %788 = vmatpush1.msra.mxu0 %v787
    %789 = vmatprep.subr.mxu0 0.0
    %790 = vmatpush1.msra.mxu0 0.0
    %791 = vmatprep.subr.mxu0 0.0
    %792 = vmatpush1.msra.mxu0 0.0
    %793 = vmatprep.subr.mxu0 0.0
    %794 = vmatpush1.msra.mxu0 0.0
    %795 = vmatprep.subr.mxu0 0.0
    %796 = vmatpush1.msra.mxu0 0.0
    %797 = vmatprep.subr.mxu0 0.0
    %798 = vmatpush1.msra.mxu0 0.0
    %799 = vmatprep.subr.mxu0 0.0
    %800 = vmatpush1.msra.mxu0 0.0
    %801 = vmatprep.subr.mxu0 0.0
    %802 = vmatpush1.msra.mxu0 0.0
    %803 = vmatprep.subr.mxu0 0.0
    %804 = vmatpush1.msra.mxu0 0.0
    %805 = vmatprep.subr.mxu0 0.0
    %806 = vmatpush1.msra.mxu0 0.0
    %807 = vmatprep.subr.mxu0 0.0
    %808 = vmatpush1.msra.mxu0 0.0
    %809 = vmatprep.subr.mxu0 0.0
    %810 = vmatpush1.msra.mxu0 0.0
    %811 = vmatprep.subr.mxu0 0.0
    %812 = vmatpush1.msra.mxu0 0.0
    %813 = vmatprep.subr.mxu0 0.0
    %814 = vmatpush1.msra.mxu0 0.0
    %815 = vmatprep.subr.mxu0 0.0
    %816 = vmatpush1.msra.mxu0 0.0
    %817 = vmatprep.subr.mxu0 0.0
    %818 = vmatpush1.msra.mxu0 0.0
    %819 = vmatprep.subr.mxu0 0.0
    %820 = vmatpush1.msra.mxu0 0.0
    %821 = vmatprep.subr.mxu0 0.0
    %822 = vmatpush1.msra.mxu0 0.0
    %823 = vmatprep.subr.mxu0 0.0
    %824 = vmatpush1.msra.mxu0 0.0
    %825 = vmatprep.subr.mxu0 0.0
    %826 = vmatpush1.msra.mxu0 0.0
    %827 = vmatprep.subr.mxu0 0.0
    %828 = vmatpush1.msra.mxu0 0.0
    %829 = vmatprep.subr.mxu0 0.0
    %830 = vmatpush1.msra.mxu0 0.0
    %831 = vmatprep.subr.mxu0 0.0
    %832 = vmatpush1.msra.mxu0 0.0
    %833 = vmatprep.subr.mxu0 0.0
    %834 = vmatpush1.msra.mxu0 0.0
    %835 = vmatprep.subr.mxu0 0.0
    %836 = vmatpush1.msra.mxu0 0.0
    %837 = vmatprep.subr.mxu0 0.0
    %838 = vmatpush1.msra.mxu0 0.0
    %839 = vmatprep.subr.mxu0 0.0
    %840 = vmatpush1.msra.mxu0 0.0
    %841 = vmatprep.subr.mxu0 0.0
    %842 = vmatpush1.msra.mxu0 0.0
    %843 = vmatprep.subr.mxu0 0.0
    %844 = vmatpush1.msra.mxu0 0.0
    %845 = vmatprep.mubr.f32.mxu0 0.0
    %v846 = vand.u32 %v601, 4294901760
    %v847 = vsub.f32 %v601, %v846
    %848 = vmatmul.mubr.f32.gmra.mrb[0].mxu0 %v847
    %v849 = vpop.f32.mrb[0].mxu0
    %v850 = vadd.f32 %v770, %v849
    %v851 = vpop.f32.mrb[0].mxu0
    %852 = vdwg.mxu0
    %853 = vmatprep.subr.mxu0 0.0
    %v854 = vand.u32 %v73, 4294901760
    %855 = vmatpush1.msra.mxu0 %v854
    %856 = vmatprep.subr.mxu0 0.0
    %v857 = vand.u32 %v74, 4294901760
    %858 = vmatpush1.msra.mxu0 %v857
    %859 = vmatprep.subr.mxu0 0.0
    %v860 = vand.u32 %v75, 4294901760
    %861 = vmatpush1.msra.mxu0 %v860
    %862 = vmatprep.subr.mxu0 0.0
    %v863 = vand.u32 %v76, 4294901760
    %864 = vmatpush1.msra.mxu0 %v863
    %865 = vmatprep.subr.mxu0 0.0
    %866 = vmatpush1.msra.mxu0 0.0
    %867 = vmatprep.subr.mxu0 0.0
    %868 = vmatpush1.msra.mxu0 0.0
    %869 = vmatprep.subr.mxu0 0.0
    %870 = vmatpush1.msra.mxu0 0.0
    %871 = vmatprep.subr.mxu0 0.0
    %872 = vmatpush1.msra.mxu0 0.0
    %873 = vmatprep.subr.mxu0 0.0
    %874 = vmatpush1.msra.mxu0 0.0
    %875 = vmatprep.subr.mxu0 0.0
    %876 = vmatpush1.msra.mxu0 0.0
    %877 = vmatprep.subr.mxu0 0.0
    %878 = vmatpush1.msra.mxu0 0.0
    %879 = vmatprep.subr.mxu0 0.0
    %880 = vmatpush1.msra.mxu0 0.0
    %881 = vmatprep.subr.mxu0 0.0
    %882 = vmatpush1.msra.mxu0 0.0
    %883 = vmatprep.subr.mxu0 0.0
    %884 = vmatpush1.msra.mxu0 0.0
    %885 = vmatprep.subr.mxu0 0.0
    %886 = vmatpush1.msra.mxu0 0.0
    %887 = vmatprep.subr.mxu0 0.0
    %888 = vmatpush1.msra.mxu0 0.0
    %889 = vmatprep.subr.mxu0 0.0
    %890 = vmatpush1.msra.mxu0 0.0
    %891 = vmatprep.subr.mxu0 0.0
    %892 = vmatpush1.msra.mxu0 0.0
    %893 = vmatprep.subr.mxu0 0.0
    %894 = vmatpush1.msra.mxu0 0.0
    %895 = vmatprep.subr.mxu0 0.0
    %896 = vmatpush1.msra.mxu0 0.0
    %897 = vmatprep.subr.mxu0 0.0
    %898 = vmatpush1.msra.mxu0 0.0
    %899 = vmatprep.subr.mxu0 0.0
    %900 = vmatpush1.msra.mxu0 0.0
    %901 = vmatprep.subr.mxu0 0.0
    %902 = vmatpush1.msra.mxu0 0.0
    %903 = vmatprep.subr.mxu0 0.0
    %904 = vmatpush1.msra.mxu0 0.0
    %905 = vmatprep.subr.mxu0 0.0
    %906 = vmatpush1.msra.mxu0 0.0
    %907 = vmatprep.subr.mxu0 0.0
    %908 = vmatpush1.msra.mxu0 0.0
    %909 = vmatprep.subr.mxu0 0.0
    %910 = vmatpush1.msra.mxu0 0.0
    %911 = vmatprep.subr.mxu0 0.0
    %912 = vmatpush1.msra.mxu0 0.0
    %913 = vmatprep.subr.mxu0 0.0
    %914 = vmatpush1.msra.mxu0 0.0
    %915 = vmatprep.subr.mxu0 0.0
    %916 = vmatpush1.msra.mxu0 0.0
    %917 = vmatprep.subr.mxu0 0.0
    %918 = vmatpush1.msra.mxu0 0.0
    %919 = vmatprep.subr.mxu0 0.0
    %920 = vmatpush1.msra.mxu0 0.0
    %921 = vmatprep.mubr.f32.mxu0 0.0
    %v922 = vand.u32 %v601, 4294901760
    %v923 = vsub.f32 %v601, %v922
    %v924 = vand.u32 %v923, 4294901760
    %925 = vmatmul.mubr.f32.gmra.mrb[0].mxu0 %v924
    %v926 = vpop.f32.mrb[0].mxu0
    %v927 = vadd.f32 %v850, %v926
    %v928 = vpop.f32.mrb[0].mxu0
    %929 = vdwg.mxu0
    %930 = vmatprep.subr.mxu0 0.0
    %v931 = vand.u32 %v73, 4294901760
    %v932 = vsub.f32 %v73, %v931
    %v933 = vand.u32 %v932, 4294901760
    %934 = vmatpush1.msra.mxu0 %v933
    %935 = vmatprep.subr.mxu0 0.0
    %v936 = vand.u32 %v74, 4294901760
    %v937 = vsub.f32 %v74, %v936
    %v938 = vand.u32 %v937, 4294901760
    %939 = vmatpush1.msra.mxu0 %v938
    %940 = vmatprep.subr.mxu0 0.0
    %v941 = vand.u32 %v75, 4294901760
    %v942 = vsub.f32 %v75, %v941
    %v943 = vand.u32 %v942, 4294901760
    %944 = vmatpush1.msra.mxu0 %v943
    %945 = vmatprep.subr.mxu0 0.0
    %v946 = vand.u32 %v76, 4294901760
    %v947 = vsub.f32 %v76, %v946
    %v948 = vand.u32 %v947, 4294901760
    %949 = vmatpush1.msra.mxu0 %v948
    %950 = vmatprep.subr.mxu0 0.0
    %951 = vmatpush1.msra.mxu0 0.0
    %952 = vmatprep.subr.mxu0 0.0
    %953 = vmatpush1.msra.mxu0 0.0
    %954 = vmatprep.subr.mxu0 0.0
    %955 = vmatpush1.msra.mxu0 0.0
    %956 = vmatprep.subr.mxu0 0.0
    %957 = vmatpush1.msra.mxu0 0.0
    %958 = vmatprep.subr.mxu0 0.0
    %959 = vmatpush1.msra.mxu0 0.0
    %960 = vmatprep.subr.mxu0 0.0
    %961 = vmatpush1.msra.mxu0 0.0
    %962 = vmatprep.subr.mxu0 0.0
    %963 = vmatpush1.msra.mxu0 0.0
    %964 = vmatprep.subr.mxu0 0.0
    %965 = vmatpush1.msra.mxu0 0.0
    %966 = vmatprep.subr.mxu0 0.0
    %967 = vmatpush1.msra.mxu0 0.0
    %968 = vmatprep.subr.mxu0 0.0
    %969 = vmatpush1.msra.mxu0 0.0
    %970 = vmatprep.subr.mxu0 0.0
    %971 = vmatpush1.msra.mxu0 0.0
    %972 = vmatprep.subr.mxu0 0.0
    %973 = vmatpush1.msra.mxu0 0.0
    %974 = vmatprep.subr.mxu0 0.0
    %975 = vmatpush1.msra.mxu0 0.0
    %976 = vmatprep.subr.mxu0 0.0
    %977 = vmatpush1.msra.mxu0 0.0
    %978 = vmatprep.subr.mxu0 0.0
    %979 = vmatpush1.msra.mxu0 0.0
    %980 = vmatprep.subr.mxu0 0.0
    %981 = vmatpush1.msra.mxu0 0.0
    %982 = vmatprep.subr.mxu0 0.0
    %983 = vmatpush1.msra.mxu0 0.0
    %984 = vmatprep.subr.mxu0 0.0
    %985 = vmatpush1.msra.mxu0 0.0
    %986 = vmatprep.subr.mxu0 0.0
    %987 = vmatpush1.msra.mxu0 0.0
    %988 = vmatprep.subr.mxu0 0.0
    %989 = vmatpush1.msra.mxu0 0.0
    %990 = vmatprep.subr.mxu0 0.0
    %991 = vmatpush1.msra.mxu0 0.0
    %992 = vmatprep.subr.mxu0 0.0
    %993 = vmatpush1.msra.mxu0 0.0
    %994 = vmatprep.subr.mxu0 0.0
    %995 = vmatpush1.msra.mxu0 0.0
    %996 = vmatprep.subr.mxu0 0.0
    %997 = vmatpush1.msra.mxu0 0.0
    %998 = vmatprep.subr.mxu0 0.0
    %999 = vmatpush1.msra.mxu0 0.0
    %1000 = vmatprep.subr.mxu0 0.0
    %1001 = vmatpush1.msra.mxu0 0.0
    %1002 = vmatprep.subr.mxu0 0.0
    %1003 = vmatpush1.msra.mxu0 0.0
    %1004 = vmatprep.subr.mxu0 0.0
    %1005 = vmatpush1.msra.mxu0 0.0
    %1006 = vmatprep.mubr.f32.mxu0 0.0
    %v1007 = vand.u32 %v601, 4294901760
    %1008 = vmatmul.mubr.f32.gmra.mrb[0].mxu0 %v1007
    %v1009 = vpop.f32.mrb[0].mxu0
    %v1010 = vadd.f32 %v927, %v1009
    %v1011 = vpop.f32.mrb[0].mxu0
    %1012 = vdwg.mxu0
    %1013 = vmatprep.subr.mxu0 0.0
    %v1014 = vand.u32 %v73, 4294901760
    %1015 = vmatpush1.msra.mxu0 %v1014
    %1016 = vmatprep.subr.mxu0 0.0
    %v1017 = vand.u32 %v74, 4294901760
    %1018 = vmatpush1.msra.mxu0 %v1017
    %1019 = vmatprep.subr.mxu0 0.0
    %v1020 = vand.u32 %v75, 4294901760
    %1021 = vmatpush1.msra.mxu0 %v1020
    %1022 = vmatprep.subr.mxu0 0.0
    %v1023 = vand.u32 %v76, 4294901760
    %1024 = vmatpush1.msra.mxu0 %v1023
    %1025 = vmatprep.subr.mxu0 0.0
    %1026 = vmatpush1.msra.mxu0 0.0
    %1027 = vmatprep.subr.mxu0 0.0
    %1028 = vmatpush1.msra.mxu0 0.0
    %1029 = vmatprep.subr.mxu0 0.0
    %1030 = vmatpush1.msra.mxu0 0.0
    %1031 = vmatprep.subr.mxu0 0.0
    %1032 = vmatpush1.msra.mxu0 0.0
    %1033 = vmatprep.subr.mxu0 0.0
    %1034 = vmatpush1.msra.mxu0 0.0
    %1035 = vmatprep.subr.mxu0 0.0
    %1036 = vmatpush1.msra.mxu0 0.0
    %1037 = vmatprep.subr.mxu0 0.0
    %1038 = vmatpush1.msra.mxu0 0.0
    %1039 = vmatprep.subr.mxu0 0.0
    %1040 = vmatpush1.msra.mxu0 0.0
    %1041 = vmatprep.subr.mxu0 0.0
    %1042 = vmatpush1.msra.mxu0 0.0
    %1043 = vmatprep.subr.mxu0 0.0
    %1044 = vmatpush1.msra.mxu0 0.0
    %1045 = vmatprep.subr.mxu0 0.0
    %1046 = vmatpush1.msra.mxu0 0.0
    %1047 = vmatprep.subr.mxu0 0.0
    %1048 = vmatpush1.msra.mxu0 0.0
    %1049 = vmatprep.subr.mxu0 0.0
    %1050 = vmatpush1.msra.mxu0 0.0
    %1051 = vmatprep.subr.mxu0 0.0
    %1052 = vmatpush1.msra.mxu0 0.0
    %1053 = vmatprep.subr.mxu0 0.0
    %1054 = vmatpush1.msra.mxu0 0.0
    %1055 = vmatprep.subr.mxu0 0.0
    %1056 = vmatpush1.msra.mxu0 0.0
    %1057 = vmatprep.subr.mxu0 0.0
    %1058 = vmatpush1.msra.mxu0 0.0
    %1059 = vmatprep.subr.mxu0 0.0
    %1060 = vmatpush1.msra.mxu0 0.0
    %1061 = vmatprep.subr.mxu0 0.0
    %1062 = vmatpush1.msra.mxu0 0.0
    %1063 = vmatprep.subr.mxu0 0.0
    %1064 = vmatpush1.msra.mxu0 0.0
    %1065 = vmatprep.subr.mxu0 0.0
    %1066 = vmatpush1.msra.mxu0 0.0
    %1067 = vmatprep.subr.mxu0 0.0
    %1068 = vmatpush1.msra.mxu0 0.0
    %1069 = vmatprep.subr.mxu0 0.0
    %1070 = vmatpush1.msra.mxu0 0.0
    %1071 = vmatprep.subr.mxu0 0.0
    %1072 = vmatpush1.msra.mxu0 0.0
    %1073 = vmatprep.subr.mxu0 0.0
    %1074 = vmatpush1.msra.mxu0 0.0
    %1075 = vmatprep.subr.mxu0 0.0
    %1076 = vmatpush1.msra.mxu0 0.0
    %1077 = vmatprep.subr.mxu0 0.0
    %1078 = vmatpush1.msra.mxu0 0.0
    %1079 = vmatprep.subr.mxu0 0.0
    %1080 = vmatpush1.msra.mxu0 0.0
    %1081 = vmatprep.mubr.f32.mxu0 0.0
    %v1082 = vand.u32 %v601, 4294901760
    %1083 = vmatmul.mubr.f32.gmra.mrb[0].mxu0 %v1082
    %v1084 = vpop.f32.mrb[0].mxu0
    %v1085 = vadd.f32 %v1010, %v1084
    %v1086 = vpop.f32.mrb[0].mxu0
    %1087 = vdwg.mxu0
    %v1088 = vld [vmem:[%s4] sm:$0x1]
    %v1090 = vlaneseq
    %v1091 = vshrl.u32 %v1090, 7
    %v1092 = vsub.s32 0, %v1091
    %v1093 = vrot.slane %v1088, %v1092
    %v1095 = vadd.f32 %v1085, %v1093
    %v1096 = vmax.f32 %v1095, 0.0
    %vm1097 = vcmask 523264
    %1098 = vst.msk [vmem:[#allocation10] sm:$0xff] %vm1097, %v1096
    // Predicated region
    $region38: #{tpu_custom_call.1} parent=1 // pred_check
      _
    $region39: #{tpu_custom_call.1} parent=1 // pred_check_branch
      %1100 = sbr.rel (0) target = $region41
    $region40: #{tpu_custom_call.1} parent=1 // pred_region
      %s1102 = ssub.s32 128, 128
      %1103 = vsyncadd [#allocation4], %s1102
      %s1105 = sshll.u32 [#allocation10], 4
      %s1106 = int_to_ptr.vmem [resolvable:$true] %s1105
      %1108 = dma.vmem_to_hbm [thread:$0]  %s1106, 128, %s5, [#allocation4]
    $region41: #{tpu_custom_call.1} parent=1 // pred_fallthru
      _
    // Predicated region
    $region42: #{tpu_custom_call.1} parent=1 // pred_check
      _
    $region43: #{tpu_custom_call.1} parent=1 // pred_check_branch
      %1110 = sbr.rel (0) target = $region45
    $region44: #{tpu_custom_call.1} parent=1 // pred_region
      %1111 = dma.done [#allocation4], 128
    $region45: #{tpu_custom_call.1} parent=1 // pred_fallthru
      _
    %1112 = vsyncpa [#allocation3], 1
    %1113 = vsyncpa [#allocation6], 1
    %1114 = vsyncpa [#allocation9], 1
    %1115 = vsyncpa [#allocation4], 1

</llo_original>
